<compile_context>
chip_gen: v7x
topology: tpu7x:2x2x1
jax: 0.10.0
libtpu: 0.0.40
codegen_flags: <defaults>
</compile_context>

<pallas_src>
import jax
import jax.numpy as jnp
from jax.experimental import pallas as pl
from jax.experimental.pallas import tpu as pltpu


_LANE = 128
_SUBLANE = 8

# Tile ceilings (valid on v5e / v6e / v7x under default scoped-VMEM limits):
# double-buffered worst case  2*(tm*tk + tk*tn)*2B + 2*(tm*tn)*4B + acc  ~= 4.5 MiB.
_TM_MAX = 512
_TN_MAX = 256
_TK_MAX = 1024

# Fast path if (x + W + b + out) bytes stay under this (double-buffered ~2x).
_FASTPATH_BYTES = 4 * 1024 * 1024

# Below this, keep a single M tile (splitting tiny batches only adds overhead).
_M_SPLIT_MIN = 128


def _round_up(x, m):
    return ((x + m - 1) // m) * m


def _pick_tile(total, cap, granule):
    """Largest multiple of `granule` that divides `total` and is <= cap."""
    t = (min(cap, total) // granule) * granule
    while t > granule:
        if total % t == 0:
            return t
        t -= granule
    return granule


def _linear_single_kernel(x_ref, w_ref, b_ref, o_ref):
    """Whole problem in one block: out = x @ w + b (f32 accumulate on MXU)."""
    o_ref[...] = (
        jnp.dot(x_ref[...], w_ref[...], preferred_element_type=jnp.float32)
        + b_ref[...]
    ).astype(o_ref.dtype)


def _linear_tiled_kernel(x_ref, w_ref, b_ref, o_ref, acc_ref):
    """One (tm, tn) output tile; K reduction over grid axis 2.

    x_ref: (tm, tk)   activations (bf16 or f32)
    w_ref: (tk, tn)   pre-transposed weight (K-major -> MXU-native feed)
    b_ref: (1,  tn)   bias (f32)
    o_ref: (tm, tn)   output tile (lane-dense: tn is a multiple of 128)
    acc_ref: (tm, tn) f32 accumulator scratch
    """
    k = pl.program_id(2)

    @pl.when(k == 0)
    def _():
        acc_ref[...] = jnp.zeros_like(acc_ref)

    acc_ref[...] += jnp.dot(
        x_ref[...], w_ref[...], preferred_element_type=jnp.float32
    )

    @pl.when(k == pl.num_programs(2) - 1)
    def _():
        o_ref[...] = (acc_ref[...] + b_ref[...]).astype(o_ref.dtype)


def prepare_params(weight, bias, compute_dtype=jnp.bfloat16):
    """One-time (init-time) layout prep.

    * Weight is transposed to (K_pad, N_pad) and zero-padded only to lane (128)
      multiples -- no per-call transpose, no over-padded K bytes on the HBM stream.
    * Stored in `compute_dtype` (bf16 by default: native MXU input; f32 accumulate
      in the kernel keeps the reduction exact). Pass jnp.float32 for bit-closer
      numerics if desired.
    * Bias stays f32 (added post-accumulation).
    Zero padding is exact: padded K rows contribute 0; padded N columns are
    sliced off by the wrapper.
    """
    out_dim, in_dim = weight.shape
    n_pad = _round_up(out_dim, _LANE)
    k_pad = _round_up(in_dim, _LANE)
    w_t = (
        jnp.zeros((k_pad, n_pad), compute_dtype)
        .at[:in_dim, :out_dim]
        .set(weight.T.astype(compute_dtype))
    )
    b_p = (
        jnp.zeros((1, n_pad), jnp.float32)
        .at[0, :out_dim]
        .set(bias.astype(jnp.float32))
    )
    return w_t, b_p


def logistic_regression_forward(x, w_t, b_p, out_dim):
    """x: (B, in_dim); w_t: (K_pad, N_pad) from prepare_params; b_p: (1, N_pad).

    Returns (B, out_dim) f32, matching PyTorch nn.Linear(in_dim, out_dim)(x)
    (up to the bf16 input rounding of the prepared weight / activations).
    """
    B, in_dim = x.shape
    k_pad, n_pad = w_t.shape
    compute_dtype = w_t.dtype

    m_pad = _round_up(B, _SUBLANE)

    # Cast activations to the compute dtype (no-op if x is already bf16 in a
    # bf16 pipeline). Only materialize a padded copy when the shape demands it.
    x_c = x if x.dtype == compute_dtype else x.astype(compute_dtype)
    if (m_pad, k_pad) != (B, in_dim):
        x_p = jnp.zeros((m_pad, k_pad), compute_dtype).at[:B, :in_dim].set(x_c)
    else:
        x_p = x_c

    elt = jnp.dtype(compute_dtype).itemsize
    total_bytes = (m_pad * k_pad + k_pad * n_pad) * elt + (m_pad * n_pad + n_pad) * 4

    # ---------------- Single-block fast path (small problems) ----------------
    if (
        m_pad <= _TM_MAX
        and n_pad <= _TN_MAX
        and k_pad <= _TK_MAX
        and total_bytes <= _FASTPATH_BYTES
    ):
        out_padded = pl.pallas_call(
            _linear_single_kernel,
            out_shape=jax.ShapeDtypeStruct((m_pad, n_pad), jnp.float32),
            grid_spec=pltpu.PrefetchScalarGridSpec(
                num_scalar_prefetch=0,
                grid=(1,),
                in_specs=[
                    pl.BlockSpec((m_pad, k_pad), lambda i: (0, 0)),
                    pl.BlockSpec((k_pad, n_pad), lambda i: (0, 0)),
                    pl.BlockSpec((1, n_pad), lambda i: (0, 0)),
                ],
                out_specs=pl.BlockSpec((m_pad, n_pad), lambda i: (0, 0)),
            ),
            compiler_params=pltpu.CompilerParams(
                dimension_semantics=("arbitrary",),
            ),
        )(x_p, w_t, b_p)
        return out_padded[:B, :out_dim]

    # --------------------------- Tiled (M, N, K) path ------------------------
    if m_pad > _TM_MAX:
        tm = _pick_tile(m_pad, _TM_MAX, _SUBLANE)
    elif m_pad >= 2 * _M_SPLIT_MIN:
        # Keep >=2 M tiles so v7x's two TensorCores both get work.
        tm = _pick_tile(m_pad, m_pad // 2, _SUBLANE)
    else:
        tm = m_pad
    tn = _pick_tile(n_pad, _TN_MAX, _LANE)
    tk = _pick_tile(k_pad, _TK_MAX, _LANE)

    grid = (m_pad // tm, n_pad // tn, k_pad // tk)

    out_padded = pl.pallas_call(
        _linear_tiled_kernel,
        out_shape=jax.ShapeDtypeStruct((m_pad, n_pad), jnp.float32),
        grid_spec=pltpu.PrefetchScalarGridSpec(
            num_scalar_prefetch=0,
            grid=grid,
            in_specs=[
                pl.BlockSpec((tm, tk), lambda i, j, k: (i, k)),  # x
                pl.BlockSpec((tk, tn), lambda i, j, k: (k, j)),  # W^T (K, N)
                pl.BlockSpec((1, tn), lambda i, j, k: (0, j)),   # bias
            ],
            out_specs=pl.BlockSpec((tm, tn), lambda i, j, k: (i, j)),
            scratch_shapes=[pltpu.VMEM((tm, tn), jnp.float32)],
        ),
        compiler_params=pltpu.CompilerParams(
            # M/N parallel -> megacore sharding on v7x; K is the reduction axis.
            dimension_semantics=("parallel", "parallel", "arbitrary"),
        ),
    )(x_p, w_t, b_p)

    return out_padded[:B, :out_dim]


if __name__ == "__main__":
    key = jax.random.PRNGKey(0)
    k_x, k_w, k_x2, k_w2 = jax.random.split(key, 4)

    # ---- Small problem (typical logistic regression): single-block fast path ----
    batch, in_dim, out_dim = 8, 32, 8

    # Mirrors nn.init.normal_(weight, 0, 0.01) and nn.init.constant_(bias, 0).
    weight = 0.01 * jax.random.normal(k_w, (out_dim, in_dim), dtype=jnp.float32)
    bias = jnp.zeros((out_dim,), dtype=jnp.float32)
    x = jax.random.normal(k_x, (batch, in_dim), dtype=jnp.float32)

    w_t, b_p = prepare_params(weight, bias)  # one-time layout prep (bf16, (K, N))
    out = jax.block_until_ready(logistic_regression_forward(x, w_t, b_p, out_dim))

    # Reference with matching bf16 input rounding (forward has no sigmoid).
    ref = (
        x.astype(jnp.bfloat16).astype(jnp.float32)
        @ weight.astype(jnp.bfloat16).astype(jnp.float32).T
        + bias
    )
    assert out.shape == (batch, out_dim)
    assert jnp.allclose(out, ref, atol=1e-3, rtol=1e-3)

    # ---- Larger problem: exercises the tiled (M, N, K) accumulation path ----
    batch2, in_dim2, out_dim2 = 256, 2048, 4
    weight2 = 0.01 * jax.random.normal(k_w2, (out_dim2, in_dim2), dtype=jnp.float32)
    bias2 = 0.1 * jnp.ones((out_dim2,), dtype=jnp.float32)
    x2 = jax.random.normal(k_x2, (batch2, in_dim2), dtype=jnp.float32)

    w_t2, b_p2 = prepare_params(weight2, bias2)
    out2 = jax.block_until_ready(
        logistic_regression_forward(x2, w_t2, b_p2, out_dim2)
    )
    ref2 = (
        x2.astype(jnp.bfloat16).astype(jnp.float32)
        @ weight2.astype(jnp.bfloat16).astype(jnp.float32).T
        + bias2
    )
    assert out2.shape == (batch2, out_dim2)
    assert jnp.allclose(out2, ref2, atol=5e-3, rtol=5e-3)

    print("KERNEL_OK")
</pallas_src>

<mosaic_0001>
module attributes {stable_mosaic.version = 11 : i64} {
  func.func @_linear_single_kernel(%arg0: i32, %arg1: memref<8x128xbf16, #tpu.memory_space<vmem>>, %arg2: memref<128x128xbf16, #tpu.memory_space<vmem>>, %arg3: memref<1x128xf32, #tpu.memory_space<vmem>>, %arg4: memref<8x128xf32, #tpu.memory_space<vmem>>) attributes {dimension_semantics = [#tpu.dimension_semantics<arbitrary>], iteration_bounds = array<i64: 1>, scalar_prefetch = 0 : i64, scratch_operands = 0 : i64, tpu.core_type = #tpu.core_type<tc>, window_params = [{pipeline_mode = #tpu.pipeline_mode<synchronous>, transform_indices = @transform_0, window_bounds = array<i64: 8, 128>}, {pipeline_mode = #tpu.pipeline_mode<synchronous>, transform_indices = @transform_1, window_bounds = array<i64: 128, 128>}, {pipeline_mode = #tpu.pipeline_mode<synchronous>, transform_indices = @transform_2, window_bounds = array<i64: 1, 128>}, {pipeline_mode = #tpu.pipeline_mode<synchronous>, transform_indices = @transform_3, window_bounds = array<i64: 8, 128>}]} {
    %c0 = arith.constant 0 : index
    %c0_0 = arith.constant 0 : index
    %0 = vector.load %arg1[%c0, %c0_0] : memref<8x128xbf16, #tpu.memory_space<vmem>>, vector<8x128xbf16>
    %c0_1 = arith.constant 0 : index
    %c0_2 = arith.constant 0 : index
    %1 = vector.load %arg2[%c0_1, %c0_2] : memref<128x128xbf16, #tpu.memory_space<vmem>>, vector<128x128xbf16>
    %cst = arith.constant dense<0.000000e+00> : vector<8x128xf32>
    %2 = tpu.matmul %0, %1, %cst {dimension_numbers = #tpu.dot_dimension_numbers<[1], [0], [0], [1], [0, 0, 1, 1], [], []>} : vector<8x128xbf16>, vector<128x128xbf16>, vector<8x128xf32> -> vector<8x128xf32>
    %c0_3 = arith.constant 0 : index
    %c0_4 = arith.constant 0 : index
    %3 = vector.load %arg3[%c0_3, %c0_4] : memref<1x128xf32, #tpu.memory_space<vmem>>, vector<1x128xf32>
    %4 = vector.broadcast %3 : vector<1x128xf32> to vector<8x128xf32>
    %5 = arith.addf %2, %4 : vector<8x128xf32>
    %c0_5 = arith.constant 0 : index
    %c0_6 = arith.constant 0 : index
    %6 = vector.load %arg4[%c0_5, %c0_6] : memref<8x128xf32, #tpu.memory_space<vmem>>, vector<8x128xf32>
    tpu.vector_store %arg4[%c0_5, %c0_6], %5 {strides = array<i32>} : memref<8x128xf32, #tpu.memory_space<vmem>>, vector<8x128xf32>,
    return
  }
  func.func @transform_0(%arg0: i32) -> (i32, i32) {
    %c0_i32 = arith.constant 0 : i32
    %c0_i32_0 = arith.constant 0 : i32
    %c0_i32_1 = arith.constant 0 : i32
    return %c0_i32, %c0_i32_0 : i32, i32
  }
  func.func @transform_1(%arg0: i32) -> (i32, i32) {
    %c0_i32 = arith.constant 0 : i32
    %c0_i32_0 = arith.constant 0 : i32
    %c0_i32_1 = arith.constant 0 : i32
    return %c0_i32, %c0_i32_0 : i32, i32
  }
  func.func @transform_2(%arg0: i32) -> (i32, i32) {
    %c0_i32 = arith.constant 0 : i32
    %c0_i32_0 = arith.constant 0 : i32
    %c0_i32_1 = arith.constant 0 : i32
    return %c0_i32, %c0_i32_0 : i32, i32
  }
  func.func @transform_3(%arg0: i32) -> (i32, i32) {
    %c0_i32 = arith.constant 0 : i32
    %c0_i32_0 = arith.constant 0 : i32
    %c0_i32_1 = arith.constant 0 : i32
    return %c0_i32, %c0_i32_0 : i32, i32
  }
}

</mosaic_0001>

<llo_original>
// kernel: tpu_custom_call.1
$region0: #{tpu_custom_call.1}
  #allocation0 [shape = 'u32[]', space=smem, size = 0x4, offset = 0x4, fixed_abs, tag = 'smem constant byte address 0x4 - core index']
  #allocation1 [shape = 'u32[144,128]{1,0:T(1,128)}', space=vmem, size = 0x12000, scoped, tag = 'internal scratch']
  %s0 = inlined_call_operand.hbm [shape: bf16[8,128], index: 0, kind: input, shape index: {}]
  %s1 = inlined_call_operand.hbm [shape: bf16[128,128], index: 1, kind: input, shape index: {}]
  %s2 = inlined_call_operand.vmem [shape: f32[1,128], index: 2, kind: input, shape index: {}]
  %s3 = inlined_call_operand.hbm [shape: f32[8,128], index: 3, kind: output, shape index: {}]
  %s4 = sld [smem:[#allocation0]]
  $region30: #{tpu_custom_call.1} parent=0
    _
  %s6 = ssub.s32 1, %s4
  %s7 = scalar_select 0, %s6, %s4
  $region1: #{tpu_custom_call.1} parent=0
    #allocation2 [shape = 'u8[2048]{0}', space=vmem, size = 0x800, scoped, tag = 'input window, operand 0, single buffered']
    #allocation3 [shape = 's32[1]{0}', space=sflag, size = 0x4, scoped, tag = 'scoped memory for tpu_custom_call.1']
    #allocation4 [shape = 's32[1]{0}', space=sflag, size = 0x4, scoped, tag = 'scoped memory for tpu_custom_call.1']
    #allocation5 [shape = 'u8[32768]{0}', space=vmem, size = 0x8000, scoped, tag = 'input window, operand 1, single buffered']
    #allocation6 [shape = 's32[1]{0}', space=sflag, size = 0x4, scoped, tag = 'scoped memory for tpu_custom_call.1']
    #allocation7 [shape = 'u8[4096]{0}', space=vmem, size = 0x1000, scoped, tag = 'output window, operand 0, single buffered']
    %8 = vsyncpa [#allocation3], 0
    %9 = vsyncpa [#allocation6], 0
    %10 = vsyncpa [#allocation4], 0
    // Predicated region
    $region2: #{tpu_custom_call.1} parent=1 // pred_check
      _
    $region3: #{tpu_custom_call.1} parent=1 // pred_check_branch
      %12 = sbr.rel (0) target = $region5
    $region4: #{tpu_custom_call.1} parent=1 // pred_region
      %s14 = ssub.s32 64, 64
      %15 = vsyncadd [#allocation3], %s14
      %s17 = sshll.u32 [#allocation2], 4
      %s18 = int_to_ptr.vmem [resolvable:$true] %s17
      %20 = dma.hbm_to_vmem [thread:$0]  %s0, 64, %s18, [#allocation3]
    $region5: #{tpu_custom_call.1} parent=1 // pred_fallthru
      _
    // Predicated region
    $region6: #{tpu_custom_call.1} parent=1 // pred_check
      _
    $region7: #{tpu_custom_call.1} parent=1 // pred_check_branch
      %22 = sbr.rel (0) target = $region9
    $region8: #{tpu_custom_call.1} parent=1 // pred_region
      %s24 = ssub.s32 1024, 1024
      %25 = vsyncadd [#allocation6], %s24
      %s26 = sshll.u32 [#allocation5], 4
      %s27 = int_to_ptr.vmem [resolvable:$true] %s26
      %32 = dma.hbm_to_vmem [thread:$0]  %s1, 1024, %s27, [#allocation6], 64, 64, 4
    $region9: #{tpu_custom_call.1} parent=1 // pred_fallthru
      _
    // Predicated region
    $region10: #{tpu_custom_call.1} parent=1 // pred_check
      _
    $region11: #{tpu_custom_call.1} parent=1 // pred_check_branch
      %34 = sbr.rel (0) target = $region13
    $region12: #{tpu_custom_call.1} parent=1 // pred_region
      _
    $region13: #{tpu_custom_call.1} parent=1 // pred_fallthru
      _
    // Predicated region
    $region14: #{tpu_custom_call.1} parent=1 // pred_check
      _
    $region15: #{tpu_custom_call.1} parent=1 // pred_check_branch
      %36 = sbr.rel (0) target = $region17
    $region16: #{tpu_custom_call.1} parent=1 // pred_region
      %37 = dma.done [#allocation3], 64
    $region17: #{tpu_custom_call.1} parent=1 // pred_fallthru
      _
    // Predicated region
    $region18: #{tpu_custom_call.1} parent=1 // pred_check
      _
    $region19: #{tpu_custom_call.1} parent=1 // pred_check_branch
      %39 = sbr.rel (0) target = $region21
    $region20: #{tpu_custom_call.1} parent=1 // pred_region
      %40 = dma.done [#allocation6], 1024
    $region21: #{tpu_custom_call.1} parent=1 // pred_fallthru
      _
    %v42 = vld [vmem:[#allocation2] sm:$0xf]
    %v43 = vld [vmem:[#allocation5] sm:$0xf]
    %v44 = vld [vmem:[#allocation5 + $0x4] sm:$0xf]
    %v45 = vld [vmem:[#allocation5 + $0x8] sm:$0xf]
    %v46 = vld [vmem:[#allocation5 + $0xc] sm:$0xf]
    %v47 = vld [vmem:[#allocation5 + $0x10] sm:$0xf]
    %v48 = vld [vmem:[#allocation5 + $0x14] sm:$0xf]
    %v49 = vld [vmem:[#allocation5 + $0x18] sm:$0xf]
    %v50 = vld [vmem:[#allocation5 + $0x1c] sm:$0xf]
    %v51 = vld [vmem:[#allocation5 + $0x20] sm:$0xf]
    %v52 = vld [vmem:[#allocation5 + $0x24] sm:$0xf]
    %v53 = vld [vmem:[#allocation5 + $0x28] sm:$0xf]
    %v54 = vld [vmem:[#allocation5 + $0x2c] sm:$0xf]
    %v55 = vld [vmem:[#allocation5 + $0x30] sm:$0xf]
    %v56 = vld [vmem:[#allocation5 + $0x34] sm:$0xf]
    %v57 = vld [vmem:[#allocation5 + $0x38] sm:$0xf]
    %v58 = vld [vmem:[#allocation5 + $0x3c] sm:$0xf]
    %v59 = vld [vmem:[%s2] sm:$0x1]
    %v61 = vlaneseq
    %v62 = vshrl.u32 %v61, 7
    %v63 = vsub.s32 0, %v62
    %v64 = vrot.slane %v59, %v63
    %v82 = vunpack.c.l.b16 %v43
    %v83 = vunpack.c.l.b16 %v44
    %v84 = vunpack.c.l.b16 %v45
    %v85 = vunpack.c.l.b16 %v46
    %v86 = vunpack.c.l.b16 %v47
    %v87 = vunpack.c.l.b16 %v48
    %v88 = vunpack.c.l.b16 %v49
    %v89 = vunpack.c.l.b16 %v50
    %v90 = vunpack.c.l.b16 %v51
    %v91 = vunpack.c.l.b16 %v52
    %v92 = vunpack.c.l.b16 %v53
    %v93 = vunpack.c.l.b16 %v54
    %v94 = vunpack.c.l.b16 %v55
    %v95 = vunpack.c.l.b16 %v56
    %v96 = vunpack.c.l.b16 %v57
    %v97 = vunpack.c.l.b16 %v58
    %v98 = vpack.c.b16 %v83, %v82
    %v99 = vpack.c.b16 %v85, %v84
    %v100 = vpack.c.b16 %v87, %v86
    %v101 = vpack.c.b16 %v89, %v88
    %v102 = vpack.c.b16 %v91, %v90
    %v103 = vpack.c.b16 %v93, %v92
    %v104 = vpack.c.b16 %v95, %v94
    %v105 = vpack.c.b16 %v97, %v96
    %114 = vmatprep.subr.bf16.mxu0 0
    %115 = vmatpush1.bf16.msra.mxu0 %v98
    %116 = vmatprep.subr.bf16.mxu0 0
    %117 = vmatpush1.bf16.msra.mxu0 %v99
    %118 = vmatprep.subr.bf16.mxu0 0
    %119 = vmatpush1.bf16.msra.mxu0 %v100
    %120 = vmatprep.subr.bf16.mxu0 0
    %121 = vmatpush1.bf16.msra.mxu0 %v101
    %122 = vmatprep.subr.bf16.mxu0 0
    %123 = vmatpush1.bf16.msra.mxu0 %v102
    %124 = vmatprep.subr.bf16.mxu0 0
    %125 = vmatpush1.bf16.msra.mxu0 %v103
    %126 = vmatprep.subr.bf16.mxu0 0
    %127 = vmatpush1.bf16.msra.mxu0 %v104
    %128 = vmatprep.subr.bf16.mxu0 0
    %129 = vmatpush1.bf16.msra.mxu0 %v105
    %130 = vmatprep.subr.bf16.mxu0 0
    %131 = vmatpush1.bf16.msra.mxu0 0
    %132 = vmatprep.subr.bf16.mxu0 0
    %133 = vmatpush1.bf16.msra.mxu0 0
    %134 = vmatprep.subr.bf16.mxu0 0
    %135 = vmatpush1.bf16.msra.mxu0 0
    %136 = vmatprep.subr.bf16.mxu0 0
    %137 = vmatpush1.bf16.msra.mxu0 0
    %138 = vmatprep.subr.bf16.mxu0 0
    %139 = vmatpush1.bf16.msra.mxu0 0
    %140 = vmatprep.subr.bf16.mxu0 0
    %141 = vmatpush1.bf16.msra.mxu0 0
    %142 = vmatprep.subr.bf16.mxu0 0
    %143 = vmatpush1.bf16.msra.mxu0 0
    %144 = vmatprep.subr.bf16.mxu0 0
    %145 = vmatpush1.bf16.msra.mxu0 0
    %146 = vmatprep.mubr.bf16.mxu0 0
    %147 = vmatmul.mubr.bf16.gmra.mrb[0].mxu0 %v42
    %v148 = vpop.f32.mrb[0].mxu0
    %v149 = vadd.f32 %v64, %v148
    %v150 = vpop.f32.mrb[0].mxu0
    %v151 = vpop.f32.mrb[0].mxu0
    %v152 = vpop.f32.mrb[0].mxu0
    %153 = vdwg.mxu0
    %154 = vst [vmem:[#allocation7] sm:$0xff] %v149
    // Predicated region
    $region22: #{tpu_custom_call.1} parent=1 // pred_check
      _
    $region23: #{tpu_custom_call.1} parent=1 // pred_check_branch
      %156 = sbr.rel (0) target = $region25
    $region24: #{tpu_custom_call.1} parent=1 // pred_region
      %s158 = ssub.s32 128, 128
      %159 = vsyncadd [#allocation4], %s158
      %s161 = sshll.u32 [#allocation7], 4
      %s162 = int_to_ptr.vmem [resolvable:$true] %s161
      %164 = dma.vmem_to_hbm [thread:$0]  %s162, 128, %s3, [#allocation4]
    $region25: #{tpu_custom_call.1} parent=1 // pred_fallthru
      _
    // Predicated region
    $region26: #{tpu_custom_call.1} parent=1 // pred_check
      _
    $region27: #{tpu_custom_call.1} parent=1 // pred_check_branch
      %166 = sbr.rel (0) target = $region29
    $region28: #{tpu_custom_call.1} parent=1 // pred_region
      %167 = dma.done [#allocation4], 128
    $region29: #{tpu_custom_call.1} parent=1 // pred_fallthru
      _
    %168 = vsyncpa [#allocation3], 1
    %169 = vsyncpa [#allocation6], 1
    %170 = vsyncpa [#allocation4], 1

</llo_original>
